<compile_context>
chip_gen: v7x
topology: tpu7x:2x2x1
jax: 0.10.0
libtpu: 0.0.40
codegen_flags: <defaults>
</compile_context>

<pallas_src>
import jax
import jax.numpy as jnp
from jax import lax
from jax.experimental import pallas as pl
from jax.experimental.pallas import tpu as pltpu

LANES = 128
SUBLANES = 8
DEFAULT_TILE_ROWS = 2048   # 2048*128*4B = 1 MiB per f32 input block (0.5 MiB bf16)
NUM_SPLITS = 2             # leading parallel axis (uses both v7x TensorCores)


def _make_kernel(rows, tile_rows, k_per_split, needs_mask):
    """Build the per-tile kernel with trace-time constants baked in."""
    n_full = (tile_rows // SUBLANES) * SUBLANES

    def kernel(x1_ref, x2_ref, out_ref):
        k = pl.program_id(1)

        @pl.when(k == 0)
        def _():
            out_ref[...] = jnp.zeros_like(out_ref)

        x1 = x1_ref[...].astype(jnp.float32)
        x2 = x2_ref[...].astype(jnp.float32)
        val = jnp.exp(-jnp.abs(x1 - x2))

        if needs_mask:
            # Zero out rows past the end of the (rows, 128) slab; covers both
            # the partial last block and clamped duplicate blocks.
            p = pl.program_id(0)
            row_off = (p * k_per_split + k) * tile_rows
            row_ids = row_off + lax.broadcasted_iota(jnp.int32, (tile_rows, 1), 0)
            val = jnp.where(row_ids < rows, val, 0.0)

        # (8, 128) vector accumulation: pure VPU vreg adds per step.
        if n_full > 0:
            out_ref[...] += val[:n_full].reshape(-1, SUBLANES, LANES).sum(axis=0)
        if n_full < tile_rows:   # only for tiny inputs where rows % 8 != 0
            r = tile_rows - n_full
            out_ref[:r, :] += val[n_full:, :]

    return kernel


def _exp_abs_diff_sum_2d(x1m, x2m):
    """sum(exp(-|x1m - x2m|)) for a lane-dense (rows, 128) pair via Pallas."""
    rows = x1m.shape[0]
    tile_rows = min(DEFAULT_TILE_ROWS, rows)
    num_tiles = -(-rows // tile_rows)
    num_splits = NUM_SPLITS if num_tiles >= NUM_SPLITS else 1
    k_per_split = -(-num_tiles // num_splits)
    needs_mask = (num_splits * k_per_split * tile_rows) != rows
    last_block = num_tiles - 1

    def in_map(p, k):
        blk = p * k_per_split + k
        if needs_mask:
            blk = jnp.minimum(blk, last_block)  # clamp overhanging blocks
        return (blk, 0)

    kernel = _make_kernel(rows, tile_rows, k_per_split, needs_mask)

    partial = pl.pallas_call(
        kernel,
        out_shape=jax.ShapeDtypeStruct((num_splits * SUBLANES, LANES), jnp.float32),
        grid_spec=pltpu.PrefetchScalarGridSpec(
            num_scalar_prefetch=0,
            grid=(num_splits, k_per_split),
            in_specs=[
                pl.BlockSpec((tile_rows, LANES), in_map),
                pl.BlockSpec((tile_rows, LANES), in_map),
            ],
            out_specs=pl.BlockSpec((SUBLANES, LANES), lambda p, k: (p, 0)),
        ),
        compiler_params=pltpu.CompilerParams(
            dimension_semantics=("parallel", "arbitrary")),
    )(x1m, x2m)
    # Single cheap tree reduce of <= num_splits*1024 partial sums in XLA.
    return jnp.sum(partial)


def vgg_loss(x1, x2):
    """mean(exp(-|x1 - x2|)) — matches PyTorch VGG_loss.forward semantics."""
    assert x1.shape == x2.shape
    n_real = x1.size
    x1f = x1.reshape(-1)
    x2f = x2.reshape(-1)

    lane_rem = n_real % LANES
    n_main = n_real - lane_rem

    total = jnp.float32(0.0)
    if n_main > 0:
        if lane_rem == 0:
            x1m = x1f.reshape(-1, LANES)
            x2m = x2f.reshape(-1, LANES)
        else:
            x1m = lax.slice(x1f, (0,), (n_main,)).reshape(-1, LANES)
            x2m = lax.slice(x2f, (0,), (n_main,)).reshape(-1, LANES)
        total = total + _exp_abs_diff_sum_2d(x1m, x2m)
    if lane_rem > 0:
        # < 128 leftover elements: plain JAX, negligible cost, no padded copies.
        t1 = lax.slice(x1f, (n_main,), (n_real,)).astype(jnp.float32)
        t2 = lax.slice(x2f, (n_main,), (n_real,)).astype(jnp.float32)
        total = total + jnp.sum(jnp.exp(-jnp.abs(t1 - t2)))
    return total / jnp.float32(n_real)


if __name__ == "__main__":
    key = jax.random.PRNGKey(0)
    k1, k2 = jax.random.split(key)
    # NCHW inputs, like the PyTorch module would receive.
    x1 = jax.random.normal(k1, (2, 4, 16, 16), dtype=jnp.float32)
    x2 = jax.random.normal(k2, (2, 4, 16, 16), dtype=jnp.float32)

    out = jax.jit(vgg_loss)(x1, x2)
    out = jax.block_until_ready(out)

    # Reference check (plain JAX)
    ref = jnp.mean(jnp.exp(-1.0 * jnp.abs(x1 - x2)))
    assert jnp.allclose(out, ref, atol=1e-5, rtol=1e-5), (out, ref)

    print("KERNEL_OK")
</pallas_src>

<mosaic_0001>
module attributes {stable_mosaic.version = 11 : i64} {
  func.func @kernel(%arg0: i32, %arg1: i32, %arg2: memref<16x128xf32, #tpu.memory_space<vmem>>, %arg3: memref<16x128xf32, #tpu.memory_space<vmem>>, %arg4: memref<8x128xf32, #tpu.memory_space<vmem>>) attributes {dimension_semantics = [#tpu.dimension_semantics<parallel>, #tpu.dimension_semantics<arbitrary>], iteration_bounds = array<i64: 1, 1>, scalar_prefetch = 0 : i64, scratch_operands = 0 : i64, tpu.core_type = #tpu.core_type<tc>, window_params = [{transform_indices = @transform_0, window_bounds = array<i64: 16, 128>}, {transform_indices = @transform_1, window_bounds = array<i64: 16, 128>}, {transform_indices = @transform_2, window_bounds = array<i64: 8, 128>}]} {
    %c0_i32 = arith.constant 0 : i32
    %0 = arith.cmpi eq, %arg1, %c0_i32 : i32
    %1 = arith.extui %0 : i1 to i32
    %c0_i32_0 = arith.constant 0 : i32
    %2 = arith.cmpi ne, %1, %c0_i32_0 : i32
    scf.if %2 {
      %cst_9 = arith.constant 0.000000e+00 : f32
      %15 = vector.broadcast %cst_9 : f32 to vector<8x128xf32>
      %c0_10 = arith.constant 0 : index
      %c0_11 = arith.constant 0 : index
      %16 = vector.load %arg4[%c0_10, %c0_11] : memref<8x128xf32, #tpu.memory_space<vmem>>, vector<8x128xf32>
      tpu.vector_store %arg4[%c0_10, %c0_11], %15 {strides = array<i32>} : memref<8x128xf32, #tpu.memory_space<vmem>>, vector<8x128xf32>,
    } else {
    }
    %c0 = arith.constant 0 : index
    %c0_1 = arith.constant 0 : index
    %3 = vector.load %arg2[%c0, %c0_1] : memref<16x128xf32, #tpu.memory_space<vmem>>, vector<16x128xf32>
    %c0_2 = arith.constant 0 : index
    %c0_3 = arith.constant 0 : index
    %4 = vector.load %arg3[%c0_2, %c0_3] : memref<16x128xf32, #tpu.memory_space<vmem>>, vector<16x128xf32>
    %5 = arith.subf %3, %4 : vector<16x128xf32>
    %6 = math.absf %5 : vector<16x128xf32>
    %cst = arith.constant 0.000000e+00 : f32
    %7 = vector.broadcast %cst : f32 to vector<16x128xf32>
    %8 = arith.subf %7, %6 : vector<16x128xf32>
    %9 = math.exp %8 : vector<16x128xf32>
    %c0_4 = arith.constant 0 : index
    %c0_5 = arith.constant 0 : index
    %10 = vector.load %arg4[%c0_4, %c0_5] : memref<8x128xf32, #tpu.memory_space<vmem>>, vector<8x128xf32>
    %11 = vector.shape_cast %9 : vector<16x128xf32> to vector<2x8x128xf32>
    %cst_6 = arith.constant dense<0.000000e+00> : vector<8x128xf32>
    %12 = vector.multi_reduction <add>, %11, %cst_6 [0] : vector<2x8x128xf32> to vector<8x128xf32>
    %13 = arith.addf %10, %12 : vector<8x128xf32>
    %c0_7 = arith.constant 0 : index
    %c0_8 = arith.constant 0 : index
    %14 = vector.load %arg4[%c0_7, %c0_8] : memref<8x128xf32, #tpu.memory_space<vmem>>, vector<8x128xf32>
    tpu.vector_store %arg4[%c0_7, %c0_8], %13 {strides = array<i32>} : memref<8x128xf32, #tpu.memory_space<vmem>>, vector<8x128xf32>,
    return
  }
  func.func @transform_0(%arg0: i32, %arg1: i32) -> (i32, i32) {
    %c1_i32 = arith.constant 1 : i32
    %0 = arith.muli %arg0, %c1_i32 : i32
    %1 = arith.addi %0, %arg1 : i32
    %c0_i32 = arith.constant 0 : i32
    %c0_i32_0 = arith.constant 0 : i32
    return %1, %c0_i32 : i32, i32
  }
  func.func @transform_1(%arg0: i32, %arg1: i32) -> (i32, i32) {
    %c1_i32 = arith.constant 1 : i32
    %0 = arith.muli %arg0, %c1_i32 : i32
    %1 = arith.addi %0, %arg1 : i32
    %c0_i32 = arith.constant 0 : i32
    %c0_i32_0 = arith.constant 0 : i32
    return %1, %c0_i32 : i32, i32
  }
  func.func @transform_2(%arg0: i32, %arg1: i32) -> (i32, i32) {
    %c0_i32 = arith.constant 0 : i32
    %c0_i32_0 = arith.constant 0 : i32
    return %arg0, %c0_i32 : i32, i32
  }
}

</mosaic_0001>

<llo_original>
// kernel: vgg_loss.1
$region0: #{vgg_loss.1}
  #allocation0 [shape = 'u32[]', space=smem, size = 0x4, offset = 0x4, fixed_abs, tag = 'smem constant byte address 0x4 - core index']
  #allocation1 [shape = 'u32[144,128]{1,0:T(1,128)}', space=vmem, size = 0x12000, scoped, tag = 'internal scratch']
  %s0 = inlined_call_operand.vmem [shape: f32[16,128], index: 0, kind: input, shape index: {}]
  %s1 = inlined_call_operand.vmem [shape: f32[16,128], index: 1, kind: input, shape index: {}]
  %s2 = inlined_call_operand.vmem [shape: f32[8,128], index: 2, kind: output, shape index: {}]
  %s3 = sld [smem:[#allocation0]]
  $region22: #{vgg_loss.1} parent=0
    _
  %s5 = ssub.s32 1, %s3
  %s6 = scalar_select 0, %s5, %s3
  // Predicated region
  $region2: #{vgg_loss.1} parent=0 // pred_check
    _
  $region3: #{vgg_loss.1} parent=0 // pred_check_branch
    %8 = sbr.rel (0) target = $region5
  $region4: #{vgg_loss.1} parent=0 // pred_region
    %s9 = sadd.s32 0, 0
    %s10 = smul.u32 2, %s9
    %p11 = scmp.lt.s32.totalorder %s10, 1
    %s12 = scalar_select %p11, %s10, 1
    %s13 = smul.addr %s12, 8
    %s14 = scalar_lea.vmem %s0, %s13
    %s15 = sadd.s32 0, 0
    %s16 = smul.u32 2, %s15
  $region5: #{vgg_loss.1} parent=0 // pred_fallthru
    _
  // Predicated region
  $region6: #{vgg_loss.1} parent=0 // pred_check
    _
  $region7: #{vgg_loss.1} parent=0 // pred_check_branch
    %18 = sbr.rel (0) target = $region9
  $region8: #{vgg_loss.1} parent=0 // pred_region
    %s19 = sadd.s32 0, 0
    %s20 = smul.u32 2, %s19
    %p21 = scmp.lt.s32.totalorder %s20, 1
    %s22 = scalar_select %p21, %s20, 1
    %s23 = smul.addr %s22, 8
    %s24 = scalar_lea.vmem %s1, %s23
    %s25 = sadd.s32 0, 0
    %s26 = smul.u32 2, %s25
  $region9: #{vgg_loss.1} parent=0 // pred_fallthru
    _
  %s27 = sadd.s32 0, 0
  %s28 = smul.u32 2, %s27
  %p29 = scmp.lt.s32.totalorder %s28, 1
  %s30 = scalar_select %p29, %s28, 1
  %s31 = smul.addr %s30, 8
  %s32 = scalar_lea.vmem %s0, %s31
  %s33 = sadd.s32 0, 0
  %s34 = smul.u32 2, %s33
  %p35 = scmp.lt.s32.totalorder %s34, 1
  %s36 = scalar_select %p35, %s34, 1
  %s37 = smul.addr %s36, 8
  %s38 = scalar_lea.vmem %s1, %s37
  %s39 = sadd.s32 0, 0
  %s40 = smul.u32 2, %s39
  %p41 = scmp.lt.s32.totalorder %s40, 1
  %s42 = scalar_select %p41, %s40, 1
  %s43 = smul.addr %s42, 8
  %s44 = scalar_lea.vmem %s0, %s43
  %s45 = sadd.s32 0, 0
  %s46 = smul.u32 2, %s45
  %s47 = sadd.s32 0, 0
  %s48 = smul.u32 2, %s47
  %p49 = scmp.lt.s32.totalorder %s48, 1
  %s50 = scalar_select %p49, %s48, 1
  %s51 = smul.addr %s50, 8
  %s52 = scalar_lea.vmem %s1, %s51
  %s53 = sadd.s32 0, 0
  %s54 = smul.u32 2, %s53
  %p55 = scmp.eq.s32.totalorder 0, 0
  // Predicated region
  $region10: #{vgg_loss.1} parent=0 // pred_check
    %p56 = pneg %p55
  $region11: #{vgg_loss.1} parent=0 // pred_check_branch
    %58 = sbr.rel (%p56) target = $region13
  $region12: #{vgg_loss.1} parent=0 // pred_region
    %59 = vst [vmem:[%s2] sm:$0xff] 0.0
  $region13: #{vgg_loss.1} parent=0 // pred_fallthru
    _
  %v60 = vld [vmem:[%s44] sm:$0xff]
  %v61 = vld [vmem:[%s44 + $0x8] sm:$0xff]
  %v62 = vld [vmem:[%s52] sm:$0xff]
  %v63 = vld [vmem:[%s52 + $0x8] sm:$0xff]
  %v64 = vsub.f32 %v60, %v62
  %v65 = vsub.f32 %v61, %v63
  %v66 = vand.u32 2147483647, %v64
  %v67 = vand.u32 2147483647, %v65
  %v68 = vsub.f32 0.0, %v66
  %v69 = vsub.f32 0.0, %v67
  %v70 = vmul.f32 %v68, 1.442695
  %v71 = vpow.pop %v70
  %v72 = vmul.f32 %v69, 1.442695
  %v73 = vpow.pop %v72
  %v74 = vld [vmem:[%s2] sm:$0xff]
  %v75 = vadd.f32 %v71, %v73
  %v76 = vadd.f32 %v74, %v75
  %77 = vst [vmem:[%s2] sm:$0xff] %v76
  // Predicated region
  $region14: #{vgg_loss.1} parent=0 // pred_check
    _
  $region15: #{vgg_loss.1} parent=0 // pred_check_branch
    %79 = sbr.rel (0) target = $region17
  $region16: #{vgg_loss.1} parent=0 // pred_region
    _
  $region17: #{vgg_loss.1} parent=0 // pred_fallthru
    _
  // Predicated region
  $region18: #{vgg_loss.1} parent=0 // pred_check
    _
  $region19: #{vgg_loss.1} parent=0 // pred_check_branch
    %81 = sbr.rel (0) target = $region21
  $region20: #{vgg_loss.1} parent=0 // pred_region
    _
  $region21: #{vgg_loss.1} parent=0 // pred_fallthru
    _

</llo_original>
